<compile_context>
chip_gen: v7x
topology: tpu7x:2x2x1
jax: 0.10.0
libtpu: 0.0.40
codegen_flags: <defaults>
</compile_context>

<pallas_src>
import jax
import jax.numpy as jnp
import numpy as np
from jax import lax
from jax.experimental import pallas as pl
from jax.experimental.pallas import tpu as pltpu


# =============================================================================
# Kernel 1: ConvTranspose2d(kernel=3, stride=3, pad=0).
# stride == kernel  =>  each output pixel receives exactly one tap:
#   out[n, 3i+ky, 3j+kx, cu] = sum_ci x[n,i,j,ci] * W[ci,cu,ky,kx] + b[cu]
# Row-tiled matmul (rows = pixels); output layout (N*H, 3, W, 3*C_up) so the
# wrapper-side "scatter" to NHWC is a pure reshape.
# =============================================================================
def _make_deconv_kernel(W, C_up):
    def kernel(x_ref, w_ref, b_ref, o_ref):
        # x_ref: (TH*W, C_in), w_ref: (C_in, 9*C_up), b_ref: (1, 9*C_up)
        y = jnp.dot(x_ref[...], w_ref[...],
                    preferred_element_type=jnp.float32) + b_ref[...]
        th = o_ref.shape[0]
        for ky in range(3):
            # columns of y are ordered (ky, kx, cu): the ky slab already has
            # the (j, kx, cu) order the spatial layout needs.
            slab = y[:, ky * 3 * C_up:(ky + 1) * 3 * C_up]      # (TH*W, 3*C_up)
            for i in range(th):
                o_ref[i, ky, :, :] = slab[i * W:(i + 1) * W, :].astype(o_ref.dtype)
    return kernel


def conv_transpose_s3(x_nchw, w_up, b_up):
    # x: (N, C_in, H, W); w_up: (C_in, C_up, 3, 3) torch layout; b_up: (C_up,)
    N, C_in, H, W = x_nchw.shape
    C_up = w_up.shape[1]

    # image-row tile: aim for a few hundred pixel rows per tile, clipped to H.
    TH = max(1, min(H, 256 // max(W, 1)))
    while H % TH:
        TH -= 1
    R = N * H                                            # total image rows

    x2 = jnp.transpose(x_nchw, (0, 2, 3, 1)).reshape(N * H * W, C_in)
    # w2[ci, ky*3*C_up + kx*C_up + cu] = w_up[ci, cu, ky, kx]
    w2 = jnp.transpose(w_up, (0, 2, 3, 1)).reshape(C_in, 9 * C_up)
    b2 = jnp.tile(b_up, 9).reshape(1, 9 * C_up)

    out = pl.pallas_call(
        _make_deconv_kernel(W, C_up),
        out_shape=jax.ShapeDtypeStruct((R, 3, W, 3 * C_up), jnp.float32),
        grid=(R // TH,),
        in_specs=[pl.BlockSpec((TH * W, C_in), lambda r: (r, 0)),
                  pl.BlockSpec((C_in, 9 * C_up), lambda r: (0, 0)),
                  pl.BlockSpec((1, 9 * C_up), lambda r: (0, 0))],
        out_specs=pl.BlockSpec((TH, 3, W, 3 * C_up), lambda r: (r, 0, 0, 0)),
        compiler_params=pltpu.CompilerParams(
            dimension_semantics=("parallel",)),
    )(x2, w2, b2)

    # pure (free) reshape: (N*H, 3, W, 3, C_up) -> (N, 3H, 3W, C_up) NHWC.
    return out.reshape(N, 3 * H, 3 * W, C_up)


# =============================================================================
# Kernel 2: fused [concat guidance] + Conv2d(3x3, pad=1, no bias)
#           + GroupNorm + ReLU, one grid step per batch element.
# Padding & channel concat are built in VMEM scratch; the conv is a single
# wide-K im2col matmul; GroupNorm stats via a group-broadcast matmul; the
# output is stored transposed (C_out, HO*WO) for lane-denser stores and a
# free NCHW reshape in the wrapper.
# =============================================================================
_COL0 = 8   # sublane-aligned column offset of the interior inside the scratch


def _make_conv_gn_relu_kernel(HO, WO, C_up, C_g, C_out, groups, eps):
    C_tot = C_up + C_g
    cg = C_out // groups
    inv_n = 1.0 / float(HO * WO * cg)
    col0 = _COL0

    def body(u, g, w_ref, gmat_ref, gamma_ref, beta_ref, o_ref, xp_u, xp_g):
        # ---- zero-padded input tiles in VMEM (no HBM pad/repeat/concat) ----
        xp_u[...] = jnp.zeros(xp_u.shape, xp_u.dtype)
        xp_u[1:1 + HO, col0:col0 + WO, :] = u
        if g is not None:
            xp_g[...] = jnp.zeros(xp_g.shape, xp_g.dtype)
            xp_g[1:1 + HO, col0:col0 + WO, :] = g

        # ---- 3x3 conv as one wide-K (9*C_tot) im2col matmul ----
        cols = []
        for ky in range(3):
            for kx in range(3):
                c0 = col0 - 1 + kx
                cols.append(
                    xp_u[ky:ky + HO, c0:c0 + WO, :].reshape(HO * WO, C_up))
                if g is not None:
                    cols.append(
                        xp_g[ky:ky + HO, c0:c0 + WO, :].reshape(HO * WO, C_g))
        patch = jnp.concatenate(cols, axis=1)                  # (HO*WO, 9*C_tot)
        acc = jnp.dot(patch, w_ref[...],
                      preferred_element_type=jnp.float32)      # (HO*WO, C_out)

        # ---- GroupNorm: stats via group-broadcast matmul (no lane slices) ----
        mean = jnp.dot(jnp.sum(acc, axis=0, keepdims=True), gmat_ref[...],
                       preferred_element_type=jnp.float32) * inv_n   # (1, C_out)
        d = acc - mean
        var = jnp.dot(jnp.sum(d * d, axis=0, keepdims=True), gmat_ref[...],
                      preferred_element_type=jnp.float32) * inv_n
        y = d * lax.rsqrt(var + eps) * gamma_ref[...] + beta_ref[...]
        y = jnp.maximum(y, 0.0)                                # ReLU

        # ---- lane-dense, NCHW-ready store: (C_out, HO*WO) ----
        o_ref[0] = jnp.transpose(y, (1, 0)).astype(o_ref.dtype)

    if C_g > 0:
        def kernel(u_ref, g_ref, w_ref, gmat_ref, gamma_ref, beta_ref,
                   o_ref, xp_u, xp_g):
            body(u_ref[0], g_ref[0], w_ref, gmat_ref, gamma_ref, beta_ref,
                 o_ref, xp_u, xp_g)
    else:
        def kernel(u_ref, w_ref, gmat_ref, gamma_ref, beta_ref, o_ref, xp_u):
            body(u_ref[0], None, w_ref, gmat_ref, gamma_ref, beta_ref,
                 o_ref, xp_u, None)
    return kernel


def conv3x3_gn_relu(u_nhwc, g_nhwc, w_conv, gamma, beta, groups, eps=1e-5):
    # u: (N, HO, WO, C_up) NHWC; g: (B, HO, WO, C_g) NHWC or None;
    # w_conv: (C_out, C_up + C_g, 3, 3) torch OIHW, bias=False.
    N, HO, WO, C_up = u_nhwc.shape
    C_out, C_tot = w_conv.shape[0], w_conv.shape[1]
    C_g = 0 if g_nhwc is None else g_nhwc.shape[-1]
    assert C_up + C_g == C_tot
    cg = C_out // groups

    # weight rows ordered (ky, kx, ci) with ci = [up channels | guidance chans]
    w2 = jnp.transpose(w_conv, (2, 3, 1, 0)).reshape(9 * C_tot, C_out)
    grp = np.arange(C_out) // cg
    gmat = jnp.asarray((grp[:, None] == grp[None, :]).astype(np.float32))
    gamma2 = jnp.asarray(gamma, jnp.float32).reshape(1, C_out)
    beta2 = jnp.asarray(beta, jnp.float32).reshape(1, C_out)

    in_specs = [pl.BlockSpec((1, HO, WO, C_up), lambda n: (n, 0, 0, 0))]
    args = [u_nhwc]
    scratch = [pltpu.VMEM((HO + 2, WO + 2 * _COL0, C_up), jnp.float32)]
    if C_g > 0:
        B = g_nhwc.shape[0]
        assert N % B == 0
        T = N // B    # einops 'B C H W -> (B T) C H W' done by the index_map
        in_specs.append(
            pl.BlockSpec((1, HO, WO, C_g), lambda n: (n // T, 0, 0, 0)))
        args.append(g_nhwc)
        scratch.append(pltpu.VMEM((HO + 2, WO + 2 * _COL0, C_g), jnp.float32))
    in_specs += [pl.BlockSpec((9 * C_tot, C_out), lambda n: (0, 0)),
                 pl.BlockSpec((C_out, C_out), lambda n: (0, 0)),
                 pl.BlockSpec((1, C_out), lambda n: (0, 0)),
                 pl.BlockSpec((1, C_out), lambda n: (0, 0))]
    args += [w2, gmat, gamma2, beta2]

    out = pl.pallas_call(
        _make_conv_gn_relu_kernel(HO, WO, C_up, C_g, C_out, groups, eps),
        out_shape=jax.ShapeDtypeStruct((N, C_out, HO * WO), jnp.float32),
        grid=(N,),
        in_specs=in_specs,
        out_specs=pl.BlockSpec((1, C_out, HO * WO), lambda n: (n, 0, 0)),
        scratch_shapes=scratch,
        compiler_params=pltpu.CompilerParams(
            dimension_semantics=("parallel",)),
    )(*args)
    return out.reshape(N, C_out, HO, WO)          # free reshape -> NCHW


# ---------------------------------------------------------------------------
# Up.forward
# ---------------------------------------------------------------------------
def up_forward(params, x_nchw, guidance_nchw=None):
    u = conv_transpose_s3(x_nchw, params['w_up'], params['b_up'])     # NHWC
    g = None
    if guidance_nchw is not None:
        g = jnp.transpose(guidance_nchw, (0, 2, 3, 1))                # NHWC (small)
    return conv3x3_gn_relu(u, g, params['w_conv'], params['gn_gamma'],
                           params['gn_beta'], params['groups'])       # NCHW


# ---------------------------------------------------------------------------
# Pure-XLA reference (numerical validation only).
# ---------------------------------------------------------------------------
def up_reference(params, x, guidance):
    w_up, b_up = params['w_up'], params['b_up']
    wt = jnp.flip(jnp.transpose(w_up, (1, 0, 2, 3)), axis=(2, 3))
    y = lax.conv_general_dilated(x, wt, window_strides=(1, 1),
                                 padding=((2, 2), (2, 2)),
                                 lhs_dilation=(3, 3),
                                 dimension_numbers=('NCHW', 'OIHW', 'NCHW'))
    y = y + b_up[None, :, None, None]
    if guidance is not None:
        T = x.shape[0] // guidance.shape[0]
        y = jnp.concatenate([y, jnp.repeat(guidance, T, axis=0)], axis=1)
    z = lax.conv_general_dilated(y, params['w_conv'], (1, 1),
                                 ((1, 1), (1, 1)),
                                 dimension_numbers=('NCHW', 'OIHW', 'NCHW'))
    N, C, H, W = z.shape
    G = params['groups']
    zr = z.reshape(N, G, C // G, H, W)
    mu = zr.mean(axis=(2, 3, 4), keepdims=True)
    var = ((zr - mu) ** 2).mean(axis=(2, 3, 4), keepdims=True)
    zn = ((zr - mu) * jax.lax.rsqrt(var + 1e-5)).reshape(N, C, H, W)
    zn = zn * params['gn_gamma'][None, :, None, None] \
            + params['gn_beta'][None, :, None, None]
    return jnp.maximum(zn, 0.0)


if __name__ == "__main__":
    # Up(in_channels=32, out_channels=32, guidance_channels=16)
    in_channels, out_channels, guidance_channels = 32, 32, 16
    up_channels = in_channels - guidance_channels      # 16
    N, Hin, Win = 2, 8, 8                               # x batch / spatial
    B = 1                                               # guidance batch (T = 2)
    Hg, Wg = 3 * Hin, 3 * Win                           # guidance matches upsampled x

    k = jax.random.split(jax.random.PRNGKey(0), 5)
    x = jax.random.normal(k[0], (N, in_channels, Hin, Win), jnp.float32)
    guidance = jax.random.normal(k[1], (B, guidance_channels, Hg, Wg), jnp.float32)

    params = dict(
        # ConvTranspose2d weight: (in_channels, in_channels - guidance_channels, 3, 3)
        w_up=jax.random.normal(k[2], (in_channels, up_channels, 3, 3), jnp.float32) * 0.05,
        b_up=jax.random.normal(k[3], (up_channels,), jnp.float32) * 0.05,
        # Conv2d weight: (out_channels, in_channels, 3, 3), bias=False
        w_conv=jax.random.normal(k[4], (out_channels, in_channels, 3, 3), jnp.float32) * 0.05,
        # GroupNorm(out_channels // 16, out_channels) default affine init
        gn_gamma=jnp.ones((out_channels,), jnp.float32),
        gn_beta=jnp.zeros((out_channels,), jnp.float32),
        groups=out_channels // 16,
    )

    out = jax.block_until_ready(up_forward(params, x, guidance))
    assert out.shape == (N, out_channels, Hg, Wg), out.shape

    ref = jax.block_until_ready(up_reference(params, x, guidance))
    np.testing.assert_allclose(np.asarray(out), np.asarray(ref),
                               rtol=2e-2, atol=2e-2)
    print("KERNEL_OK")
</pallas_src>

<mosaic_0001>
module attributes {stable_mosaic.version = 11 : i64} {
  func.func @kernel(%arg0: i32, %arg1: memref<64x32xf32, #tpu.memory_space<vmem>>, %arg2: memref<32x144xf32, #tpu.memory_space<vmem>>, %arg3: memref<1x144xf32, #tpu.memory_space<vmem>>, %arg4: memref<8x3x8x48xf32, #tpu.memory_space<vmem>>) attributes {dimension_semantics = [#tpu.dimension_semantics<parallel>], iteration_bounds = array<i64: 2>, scalar_prefetch = 0 : i64, scratch_operands = 0 : i64, tpu.core_type = #tpu.core_type<tc>, window_params = [{transform_indices = @transform_0, window_bounds = array<i64: 64, 32>}, {pipeline_mode = #tpu.pipeline_mode<synchronous>, transform_indices = @transform_1, window_bounds = array<i64: 32, 144>}, {pipeline_mode = #tpu.pipeline_mode<synchronous>, transform_indices = @transform_2, window_bounds = array<i64: 1, 144>}, {transform_indices = @transform_3, window_bounds = array<i64: 8, 3, 8, 48>}]} {
    %c0 = arith.constant 0 : index
    %c0_0 = arith.constant 0 : index
    %0 = vector.load %arg1[%c0, %c0_0] : memref<64x32xf32, #tpu.memory_space<vmem>>, vector<64x32xf32>
    %c0_1 = arith.constant 0 : index
    %c0_2 = arith.constant 0 : index
    %1 = vector.load %arg2[%c0_1, %c0_2] : memref<32x144xf32, #tpu.memory_space<vmem>>, vector<32x144xf32>
    %cst = arith.constant dense<0.000000e+00> : vector<64x144xf32>
    %2 = tpu.matmul %0, %1, %cst {dimension_numbers = #tpu.dot_dimension_numbers<[1], [0], [0], [1], [0, 0, 1, 1], [], []>} : vector<64x32xf32>, vector<32x144xf32>, vector<64x144xf32> -> vector<64x144xf32>
    %c0_3 = arith.constant 0 : index
    %c0_4 = arith.constant 0 : index
    %3 = vector.load %arg3[%c0_3, %c0_4] : memref<1x144xf32, #tpu.memory_space<vmem>>, vector<1x144xf32>
    %4 = vector.broadcast %3 : vector<1x144xf32> to vector<64x144xf32>
    %5 = arith.addf %2, %4 : vector<64x144xf32>
    %6 = vector.extract_strided_slice %5 {offsets = [0, 0], sizes = [64, 48], strides = [1, 1]} : vector<64x144xf32> to vector<64x48xf32>
    %7 = vector.extract_strided_slice %6 {offsets = [0, 0], sizes = [8, 48], strides = [1, 1]} : vector<64x48xf32> to vector<8x48xf32>
    %c0_5 = arith.constant 0 : index
    %c0_6 = arith.constant 0 : index
    %c0_7 = arith.constant 0 : index
    %c0_8 = arith.constant 0 : index
    %8 = vector.load %arg4[%c0_5, %c0_6, %c0_7, %c0_8] : memref<8x3x8x48xf32, #tpu.memory_space<vmem>>, vector<1x1x8x48xf32>
    %9 = vector.shape_cast %8 : vector<1x1x8x48xf32> to vector<8x48xf32>
    %10 = vector.shape_cast %7 : vector<8x48xf32> to vector<1x1x8x48xf32>
    tpu.vector_store %arg4[%c0_5, %c0_6, %c0_7, %c0_8], %10 {strides = array<i32>} : memref<8x3x8x48xf32, #tpu.memory_space<vmem>>, vector<1x1x8x48xf32>,
    %11 = vector.extract_strided_slice %6 {offsets = [8, 0], sizes = [8, 48], strides = [1, 1]} : vector<64x48xf32> to vector<8x48xf32>
    %c1 = arith.constant 1 : index
    %c0_9 = arith.constant 0 : index
    %c0_10 = arith.constant 0 : index
    %c0_11 = arith.constant 0 : index
    %12 = vector.load %arg4[%c1, %c0_9, %c0_10, %c0_11] : memref<8x3x8x48xf32, #tpu.memory_space<vmem>>, vector<1x1x8x48xf32>
    %13 = vector.shape_cast %12 : vector<1x1x8x48xf32> to vector<8x48xf32>
    %14 = vector.shape_cast %11 : vector<8x48xf32> to vector<1x1x8x48xf32>
    tpu.vector_store %arg4[%c1, %c0_9, %c0_10, %c0_11], %14 {strides = array<i32>} : memref<8x3x8x48xf32, #tpu.memory_space<vmem>>, vector<1x1x8x48xf32>,
    %15 = vector.extract_strided_slice %6 {offsets = [16, 0], sizes = [8, 48], strides = [1, 1]} : vector<64x48xf32> to vector<8x48xf32>
    %c2 = arith.constant 2 : index
    %c0_12 = arith.constant 0 : index
    %c0_13 = arith.constant 0 : index
    %c0_14 = arith.constant 0 : index
    %16 = vector.load %arg4[%c2, %c0_12, %c0_13, %c0_14] : memref<8x3x8x48xf32, #tpu.memory_space<vmem>>, vector<1x1x8x48xf32>
    %17 = vector.shape_cast %16 : vector<1x1x8x48xf32> to vector<8x48xf32>
    %18 = vector.shape_cast %15 : vector<8x48xf32> to vector<1x1x8x48xf32>
    tpu.vector_store %arg4[%c2, %c0_12, %c0_13, %c0_14], %18 {strides = array<i32>} : memref<8x3x8x48xf32, #tpu.memory_space<vmem>>, vector<1x1x8x48xf32>,
    %19 = vector.extract_strided_slice %6 {offsets = [24, 0], sizes = [8, 48], strides = [1, 1]} : vector<64x48xf32> to vector<8x48xf32>
    %c3 = arith.constant 3 : index
    %c0_15 = arith.constant 0 : index
    %c0_16 = arith.constant 0 : index
    %c0_17 = arith.constant 0 : index
    %20 = vector.load %arg4[%c3, %c0_15, %c0_16, %c0_17] : memref<8x3x8x48xf32, #tpu.memory_space<vmem>>, vector<1x1x8x48xf32>
    %21 = vector.shape_cast %20 : vector<1x1x8x48xf32> to vector<8x48xf32>
    %22 = vector.shape_cast %19 : vector<8x48xf32> to vector<1x1x8x48xf32>
    tpu.vector_store %arg4[%c3, %c0_15, %c0_16, %c0_17], %22 {strides = array<i32>} : memref<8x3x8x48xf32, #tpu.memory_space<vmem>>, vector<1x1x8x48xf32>,
    %23 = vector.extract_strided_slice %6 {offsets = [32, 0], sizes = [8, 48], strides = [1, 1]} : vector<64x48xf32> to vector<8x48xf32>
    %c4 = arith.constant 4 : index
    %c0_18 = arith.constant 0 : index
    %c0_19 = arith.constant 0 : index
    %c0_20 = arith.constant 0 : index
    %24 = vector.load %arg4[%c4, %c0_18, %c0_19, %c0_20] : memref<8x3x8x48xf32, #tpu.memory_space<vmem>>, vector<1x1x8x48xf32>
    %25 = vector.shape_cast %24 : vector<1x1x8x48xf32> to vector<8x48xf32>
    %26 = vector.shape_cast %23 : vector<8x48xf32> to vector<1x1x8x48xf32>
    tpu.vector_store %arg4[%c4, %c0_18, %c0_19, %c0_20], %26 {strides = array<i32>} : memref<8x3x8x48xf32, #tpu.memory_space<vmem>>, vector<1x1x8x48xf32>,
    %27 = vector.extract_strided_slice %6 {offsets = [40, 0], sizes = [8, 48], strides = [1, 1]} : vector<64x48xf32> to vector<8x48xf32>
    %c5 = arith.constant 5 : index
    %c0_21 = arith.constant 0 : index
    %c0_22 = arith.constant 0 : index
    %c0_23 = arith.constant 0 : index
    %28 = vector.load %arg4[%c5, %c0_21, %c0_22, %c0_23] : memref<8x3x8x48xf32, #tpu.memory_space<vmem>>, vector<1x1x8x48xf32>
    %29 = vector.shape_cast %28 : vector<1x1x8x48xf32> to vector<8x48xf32>
    %30 = vector.shape_cast %27 : vector<8x48xf32> to vector<1x1x8x48xf32>
    tpu.vector_store %arg4[%c5, %c0_21, %c0_22, %c0_23], %30 {strides = array<i32>} : memref<8x3x8x48xf32, #tpu.memory_space<vmem>>, vector<1x1x8x48xf32>,
    %31 = vector.extract_strided_slice %6 {offsets = [48, 0], sizes = [8, 48], strides = [1, 1]} : vector<64x48xf32> to vector<8x48xf32>
    %c6 = arith.constant 6 : index
    %c0_24 = arith.constant 0 : index
    %c0_25 = arith.constant 0 : index
    %c0_26 = arith.constant 0 : index
    %32 = vector.load %arg4[%c6, %c0_24, %c0_25, %c0_26] : memref<8x3x8x48xf32, #tpu.memory_space<vmem>>, vector<1x1x8x48xf32>
    %33 = vector.shape_cast %32 : vector<1x1x8x48xf32> to vector<8x48xf32>
    %34 = vector.shape_cast %31 : vector<8x48xf32> to vector<1x1x8x48xf32>
    tpu.vector_store %arg4[%c6, %c0_24, %c0_25, %c0_26], %34 {strides = array<i32>} : memref<8x3x8x48xf32, #tpu.memory_space<vmem>>, vector<1x1x8x48xf32>,
    %35 = vector.extract_strided_slice %6 {offsets = [56, 0], sizes = [8, 48], strides = [1, 1]} : vector<64x48xf32> to vector<8x48xf32>
    %c7 = arith.constant 7 : index
    %c0_27 = arith.constant 0 : index
    %c0_28 = arith.constant 0 : index
    %c0_29 = arith.constant 0 : index
    %36 = vector.load %arg4[%c7, %c0_27, %c0_28, %c0_29] : memref<8x3x8x48xf32, #tpu.memory_space<vmem>>, vector<1x1x8x48xf32>
    %37 = vector.shape_cast %36 : vector<1x1x8x48xf32> to vector<8x48xf32>
    %38 = vector.shape_cast %35 : vector<8x48xf32> to vector<1x1x8x48xf32>
    tpu.vector_store %arg4[%c7, %c0_27, %c0_28, %c0_29], %38 {strides = array<i32>} : memref<8x3x8x48xf32, #tpu.memory_space<vmem>>, vector<1x1x8x48xf32>,
    %39 = vector.extract_strided_slice %5 {offsets = [0, 48], sizes = [64, 48], strides = [1, 1]} : vector<64x144xf32> to vector<64x48xf32>
    %40 = vector.extract_strided_slice %39 {offsets = [0, 0], sizes = [8, 48], strides = [1, 1]} : vector<64x48xf32> to vector<8x48xf32>
    %c0_30 = arith.constant 0 : index
    %c1_31 = arith.constant 1 : index
    %c0_32 = arith.constant 0 : index
    %c0_33 = arith.constant 0 : index
    %41 = vector.load %arg4[%c0_30, %c1_31, %c0_32, %c0_33] : memref<8x3x8x48xf32, #tpu.memory_space<vmem>>, vector<1x1x8x48xf32>
    %42 = vector.shape_cast %41 : vector<1x1x8x48xf32> to vector<8x48xf32>
    %43 = vector.shape_cast %40 : vector<8x48xf32> to vector<1x1x8x48xf32>
    tpu.vector_store %arg4[%c0_30, %c1_31, %c0_32, %c0_33], %43 {strides = array<i32>} : memref<8x3x8x48xf32, #tpu.memory_space<vmem>>, vector<1x1x8x48xf32>,
    %44 = vector.extract_strided_slice %39 {offsets = [8, 0], sizes = [8, 48], strides = [1, 1]} : vector<64x48xf32> to vector<8x48xf32>
    %c1_34 = arith.constant 1 : index
    %c1_35 = arith.constant 1 : index
    %c0_36 = arith.constant 0 : index
    %c0_37 = arith.constant 0 : index
    %45 = vector.load %arg4[%c1_34, %c1_35, %c0_36, %c0_37] : memref<8x3x8x48xf32, #tpu.memory_space<vmem>>, vector<1x1x8x48xf32>
    %46 = vector.shape_cast %45 : vector<1x1x8x48xf32> to vector<8x48xf32>
    %47 = vector.shape_cast %44 : vector<8x48xf32> to vector<1x1x8x48xf32>
    tpu.vector_store %arg4[%c1_34, %c1_35, %c0_36, %c0_37], %47 {strides = array<i32>} : memref<8x3x8x48xf32, #tpu.memory_space<vmem>>, vector<1x1x8x48xf32>,
    %48 = vector.extract_strided_slice %39 {offsets = [16, 0], sizes = [8, 48], strides = [1, 1]} : vector<64x48xf32> to vector<8x48xf32>
    %c2_38 = arith.constant 2 : index
    %c1_39 = arith.constant 1 : index
    %c0_40 = arith.constant 0 : index
    %c0_41 = arith.constant 0 : index
    %49 = vector.load %arg4[%c2_38, %c1_39, %c0_40, %c0_41] : memref<8x3x8x48xf32, #tpu.memory_space<vmem>>, vector<1x1x8x48xf32>
    %50 = vector.shape_cast %49 : vector<1x1x8x48xf32> to vector<8x48xf32>
    %51 = vector.shape_cast %48 : vector<8x48xf32> to vector<1x1x8x48xf32>
    tpu.vector_store %arg4[%c2_38, %c1_39, %c0_40, %c0_41], %51 {strides = array<i32>} : memref<8x3x8x48xf32, #tpu.memory_space<vmem>>, vector<1x1x8x48xf32>,
    %52 = vector.extract_strided_slice %39 {offsets = [24, 0], sizes = [8, 48], strides = [1, 1]} : vector<64x48xf32> to vector<8x48xf32>
    %c3_42 = arith.constant 3 : index
    %c1_43 = arith.constant 1 : index
    %c0_44 = arith.constant 0 : index
    %c0_45 = arith.constant 0 : index
    %53 = vector.load %arg4[%c3_42, %c1_43, %c0_44, %c0_45] : memref<8x3x8x48xf32, #tpu.memory_space<vmem>>, vector<1x1x8x48xf32>
    %54 = vector.shape_cast %53 : vector<1x1x8x48xf32> to vector<8x48xf32>
    %55 = vector.shape_cast %52 : vector<8x48xf32> to vector<1x1x8x48xf32>
    tpu.vector_store %arg4[%c3_42, %c1_43, %c0_44, %c0_45], %55 {strides = array<i32>} : memref<8x3x8x48xf32, #tpu.memory_space<vmem>>, vector<1x1x8x48xf32>,
    %56 = vector.extract_strided_slice %39 {offsets = [32, 0], sizes = [8, 48], strides = [1, 1]} : vector<64x48xf32> to vector<8x48xf32>
    %c4_46 = arith.constant 4 : index
    %c1_47 = arith.constant 1 : index
    %c0_48 = arith.constant 0 : index
    %c0_49 = arith.constant 0 : index
    %57 = vector.load %arg4[%c4_46, %c1_47, %c0_48, %c0_49] : memref<8x3x8x48xf32, #tpu.memory_space<vmem>>, vector<1x1x8x48xf32>
    %58 = vector.shape_cast %57 : vector<1x1x8x48xf32> to vector<8x48xf32>
    %59 = vector.shape_cast %56 : vector<8x48xf32> to vector<1x1x8x48xf32>
    tpu.vector_store %arg4[%c4_46, %c1_47, %c0_48, %c0_49], %59 {strides = array<i32>} : memref<8x3x8x48xf32, #tpu.memory_space<vmem>>, vector<1x1x8x48xf32>,
    %60 = vector.extract_strided_slice %39 {offsets = [40, 0], sizes = [8, 48], strides = [1, 1]} : vector<64x48xf32> to vector<8x48xf32>
    %c5_50 = arith.constant 5 : index
    %c1_51 = arith.constant 1 : index
    %c0_52 = arith.constant 0 : index
    %c0_53 = arith.constant 0 : index
    %61 = vector.load %arg4[%c5_50, %c1_51, %c0_52, %c0_53] : memref<8x3x8x48xf32, #tpu.memory_space<vmem>>, vector<1x1x8x48xf32>
    %62 = vector.shape_cast %61 : vector<1x1x8x48xf32> to vector<8x48xf32>
    %63 = vector.shape_cast %60 : vector<8x48xf32> to vector<1x1x8x48xf32>
    tpu.vector_store %arg4[%c5_50, %c1_51, %c0_52, %c0_53], %63 {strides = array<i32>} : memref<8x3x8x48xf32, #tpu.memory_space<vmem>>, vector<1x1x8x48xf32>,
    %64 = vector.extract_strided_slice %39 {offsets = [48, 0], sizes = [8, 48], strides = [1, 1]} : vector<64x48xf32> to vector<8x48xf32>
    %c6_54 = arith.constant 6 : index
    %c1_55 = arith.constant 1 : index
    %c0_56 = arith.constant 0 : index
    %c0_57 = arith.constant 0 : index
    %65 = vector.load %arg4[%c6_54, %c1_55, %c0_56, %c0_57] : memref<8x3x8x48xf32, #tpu.memory_space<vmem>>, vector<1x1x8x48xf32>
    %66 = vector.shape_cast %65 : vector<1x1x8x48xf32> to vector<8x48xf32>
    %67 = vector.shape_cast %64 : vector<8x48xf32> to vector<1x1x8x48xf32>
    tpu.vector_store %arg4[%c6_54, %c1_55, %c0_56, %c0_57], %67 {strides = array<i32>} : memref<8x3x8x48xf32, #tpu.memory_space<vmem>>, vector<1x1x8x48xf32>,
    %68 = vector.extract_strided_slice %39 {offsets = [56, 0], sizes = [8, 48], strides = [1, 1]} : vector<64x48xf32> to vector<8x48xf32>
    %c7_58 = arith.constant 7 : index
    %c1_59 = arith.constant 1 : index
    %c0_60 = arith.constant 0 : index
    %c0_61 = arith.constant 0 : index
    %69 = vector.load %arg4[%c7_58, %c1_59, %c0_60, %c0_61] : memref<8x3x8x48xf32, #tpu.memory_space<vmem>>, vector<1x1x8x48xf32>
    %70 = vector.shape_cast %69 : vector<1x1x8x48xf32> to vector<8x48xf32>
    %71 = vector.shape_cast %68 : vector<8x48xf32> to vector<1x1x8x48xf32>
    tpu.vector_store %arg4[%c7_58, %c1_59, %c0_60, %c0_61], %71 {strides = array<i32>} : memref<8x3x8x48xf32, #tpu.memory_space<vmem>>, vector<1x1x8x48xf32>,
    %72 = vector.extract_strided_slice %5 {offsets = [0, 96], sizes = [64, 48], strides = [1, 1]} : vector<64x144xf32> to vector<64x48xf32>
    %73 = vector.extract_strided_slice %72 {offsets = [0, 0], sizes = [8, 48], strides = [1, 1]} : vector<64x48xf32> to vector<8x48xf32>
    %c0_62 = arith.constant 0 : index
    %c2_63 = arith.constant 2 : index
    %c0_64 = arith.constant 0 : index
    %c0_65 = arith.constant 0 : index
    %74 = vector.load %arg4[%c0_62, %c2_63, %c0_64, %c0_65] : memref<8x3x8x48xf32, #tpu.memory_space<vmem>>, vector<1x1x8x48xf32>
    %75 = vector.shape_cast %74 : vector<1x1x8x48xf32> to vector<8x48xf32>
    %76 = vector.shape_cast %73 : vector<8x48xf32> to vector<1x1x8x48xf32>
    tpu.vector_store %arg4[%c0_62, %c2_63, %c0_64, %c0_65], %76 {strides = array<i32>} : memref<8x3x8x48xf32, #tpu.memory_space<vmem>>, vector<1x1x8x48xf32>,
    %77 = vector.extract_strided_slice %72 {offsets = [8, 0], sizes = [8, 48], strides = [1, 1]} : vector<64x48xf32> to vector<8x48xf32>
    %c1_66 = arith.constant 1 : index
    %c2_67 = arith.constant 2 : index
    %c0_68 = arith.constant 0 : index
    %c0_69 = arith.constant 0 : index
    %78 = vector.load %arg4[%c1_66, %c2_67, %c0_68, %c0_69] : memref<8x3x8x48xf32, #tpu.memory_space<vmem>>, vector<1x1x8x48xf32>
    %79 = vector.shape_cast %78 : vector<1x1x8x48xf32> to vector<8x48xf32>
    %80 = vector.shape_cast %77 : vector<8x48xf32> to vector<1x1x8x48xf32>
    tpu.vector_store %arg4[%c1_66, %c2_67, %c0_68, %c0_69], %80 {strides = array<i32>} : memref<8x3x8x48xf32, #tpu.memory_space<vmem>>, vector<1x1x8x48xf32>,
    %81 = vector.extract_strided_slice %72 {offsets = [16, 0], sizes = [8, 48], strides = [1, 1]} : vector<64x48xf32> to vector<8x48xf32>
    %c2_70 = arith.constant 2 : index
    %c2_71 = arith.constant 2 : index
    %c0_72 = arith.constant 0 : index
    %c0_73 = arith.constant 0 : index
    %82 = vector.load %arg4[%c2_70, %c2_71, %c0_72, %c0_73] : memref<8x3x8x48xf32, #tpu.memory_space<vmem>>, vector<1x1x8x48xf32>
    %83 = vector.shape_cast %82 : vector<1x1x8x48xf32> to vector<8x48xf32>
    %84 = vector.shape_cast %81 : vector<8x48xf32> to vector<1x1x8x48xf32>
    tpu.vector_store %arg4[%c2_70, %c2_71, %c0_72, %c0_73], %84 {strides = array<i32>} : memref<8x3x8x48xf32, #tpu.memory_space<vmem>>, vector<1x1x8x48xf32>,
    %85 = vector.extract_strided_slice %72 {offsets = [24, 0], sizes = [8, 48], strides = [1, 1]} : vector<64x48xf32> to vector<8x48xf32>
    %c3_74 = arith.constant 3 : index
    %c2_75 = arith.constant 2 : index
    %c0_76 = arith.constant 0 : index
    %c0_77 = arith.constant 0 : index
    %86 = vector.load %arg4[%c3_74, %c2_75, %c0_76, %c0_77] : memref<8x3x8x48xf32, #tpu.memory_space<vmem>>, vector<1x1x8x48xf32>
    %87 = vector.shape_cast %86 : vector<1x1x8x48xf32> to vector<8x48xf32>
    %88 = vector.shape_cast %85 : vector<8x48xf32> to vector<1x1x8x48xf32>
    tpu.vector_store %arg4[%c3_74, %c2_75, %c0_76, %c0_77], %88 {strides = array<i32>} : memref<8x3x8x48xf32, #tpu.memory_space<vmem>>, vector<1x1x8x48xf32>,
    %89 = vector.extract_strided_slice %72 {offsets = [32, 0], sizes = [8, 48], strides = [1, 1]} : vector<64x48xf32> to vector<8x48xf32>
    %c4_78 = arith.constant 4 : index
    %c2_79 = arith.constant 2 : index
    %c0_80 = arith.constant 0 : index
    %c0_81 = arith.constant 0 : index
    %90 = vector.load %arg4[%c4_78, %c2_79, %c0_80, %c0_81] : memref<8x3x8x48xf32, #tpu.memory_space<vmem>>, vector<1x1x8x48xf32>
    %91 = vector.shape_cast %90 : vector<1x1x8x48xf32> to vector<8x48xf32>
    %92 = vector.shape_cast %89 : vector<8x48xf32> to vector<1x1x8x48xf32>
    tpu.vector_store %arg4[%c4_78, %c2_79, %c0_80, %c0_81], %92 {strides = array<i32>} : memref<8x3x8x48xf32, #tpu.memory_space<vmem>>, vector<1x1x8x48xf32>,
    %93 = vector.extract_strided_slice %72 {offsets = [40, 0], sizes = [8, 48], strides = [1, 1]} : vector<64x48xf32> to vector<8x48xf32>
    %c5_82 = arith.constant 5 : index
    %c2_83 = arith.constant 2 : index
    %c0_84 = arith.constant 0 : index
    %c0_85 = arith.constant 0 : index
    %94 = vector.load %arg4[%c5_82, %c2_83, %c0_84, %c0_85] : memref<8x3x8x48xf32, #tpu.memory_space<vmem>>, vector<1x1x8x48xf32>
    %95 = vector.shape_cast %94 : vector<1x1x8x48xf32> to vector<8x48xf32>
    %96 = vector.shape_cast %93 : vector<8x48xf32> to vector<1x1x8x48xf32>
    tpu.vector_store %arg4[%c5_82, %c2_83, %c0_84, %c0_85], %96 {strides = array<i32>} : memref<8x3x8x48xf32, #tpu.memory_space<vmem>>, vector<1x1x8x48xf32>,
    %97 = vector.extract_strided_slice %72 {offsets = [48, 0], sizes = [8, 48], strides = [1, 1]} : vector<64x48xf32> to vector<8x48xf32>
    %c6_86 = arith.constant 6 : index
    %c2_87 = arith.constant 2 : index
    %c0_88 = arith.constant 0 : index
    %c0_89 = arith.constant 0 : index
    %98 = vector.load %arg4[%c6_86, %c2_87, %c0_88, %c0_89] : memref<8x3x8x48xf32, #tpu.memory_space<vmem>>, vector<1x1x8x48xf32>
    %99 = vector.shape_cast %98 : vector<1x1x8x48xf32> to vector<8x48xf32>
    %100 = vector.shape_cast %97 : vector<8x48xf32> to vector<1x1x8x48xf32>
    tpu.vector_store %arg4[%c6_86, %c2_87, %c0_88, %c0_89], %100 {strides = array<i32>} : memref<8x3x8x48xf32, #tpu.memory_space<vmem>>, vector<1x1x8x48xf32>,
    %101 = vector.extract_strided_slice %72 {offsets = [56, 0], sizes = [8, 48], strides = [1, 1]} : vector<64x48xf32> to vector<8x48xf32>
    %c7_90 = arith.constant 7 : index
    %c2_91 = arith.constant 2 : index
    %c0_92 = arith.constant 0 : index
    %c0_93 = arith.constant 0 : index
    %102 = vector.load %arg4[%c7_90, %c2_91, %c0_92, %c0_93] : memref<8x3x8x48xf32, #tpu.memory_space<vmem>>, vector<1x1x8x48xf32>
    %103 = vector.shape_cast %102 : vector<1x1x8x48xf32> to vector<8x48xf32>
    %104 = vector.shape_cast %101 : vector<8x48xf32> to vector<1x1x8x48xf32>
    tpu.vector_store %arg4[%c7_90, %c2_91, %c0_92, %c0_93], %104 {strides = array<i32>} : memref<8x3x8x48xf32, #tpu.memory_space<vmem>>, vector<1x1x8x48xf32>,
    return
  }
  func.func @transform_0(%arg0: i32) -> (i32, i32) {
    %c0_i32 = arith.constant 0 : i32
    %c0_i32_0 = arith.constant 0 : i32
    return %arg0, %c0_i32 : i32, i32
  }
  func.func @transform_1(%arg0: i32) -> (i32, i32) {
    %c0_i32 = arith.constant 0 : i32
    %c0_i32_0 = arith.constant 0 : i32
    %c0_i32_1 = arith.constant 0 : i32
    return %c0_i32, %c0_i32_0 : i32, i32
  }
  func.func @transform_2(%arg0: i32) -> (i32, i32) {
    %c0_i32 = arith.constant 0 : i32
    %c0_i32_0 = arith.constant 0 : i32
    %c0_i32_1 = arith.constant 0 : i32
    return %c0_i32, %c0_i32_0 : i32, i32
  }
  func.func @transform_3(%arg0: i32) -> (i32, i32, i32, i32) {
    %c0_i32 = arith.constant 0 : i32
    %c0_i32_0 = arith.constant 0 : i32
    %c0_i32_1 = arith.constant 0 : i32
    %c0_i32_2 = arith.constant 0 : i32
    return %arg0, %c0_i32, %c0_i32_0, %c0_i32_1 : i32, i32, i32, i32
  }
}

</mosaic_0001>

<llo_original>
// kernel: tpu_custom_call.1
$region0: #{tpu_custom_call.1}
  #allocation0 [shape = 'u32[]', space=smem, size = 0x4, offset = 0x4, fixed_abs, tag = 'smem constant byte address 0x4 - core index']
  #allocation1 [shape = 'u32[144,128]{1,0:T(1,128)}', space=vmem, size = 0x12000, scoped, tag = 'internal scratch']
  %s0 = inlined_call_operand.vmem [shape: f32[128,32], index: 0, kind: input, shape index: {}]
  %s1 = inlined_call_operand.vmem [shape: f32[32,144], index: 1, kind: input, shape index: {}]
  %s2 = inlined_call_operand.vmem [shape: f32[1,144], index: 2, kind: input, shape index: {}]
  %s3 = inlined_call_operand.hbm [shape: f32[16,3,8,48], index: 3, kind: output, shape index: {}]
  %s4 = sld [smem:[#allocation0]]
  $region45: #{tpu_custom_call.1} parent=0
    _
  %s6 = ssub.s32 1, %s4
  %s7 = scalar_select 0, %s6, %s4
  $region1: #{tpu_custom_call.1} parent=0
    #allocation2 [shape = 'u8[196608]{0}', space=vmem, size = 0x30000, scoped, tag = 'output window, operand 0']
    #allocation3 [shape = 's32[2]{0}', space=sflag, size = 0x8, scoped, tag = 'scoped memory for tpu_custom_call.1']
    %8 = vsyncpa [#allocation3], 0
    %s9 = scalar_lea.sflag [#allocation3], 1
    %10 = vsyncpa %s9, 0
    loop: start=0, step=1, limit=4
    $region2: #{tpu_custom_call.1} parent=1 // loop_pre_header
      _
    $region3: #{tpu_custom_call.1} parent=1 // loop_header
      %s12 = sphi 0, %s16
      %p13 = scmp.ge.s32.totalorder %s12, 4
      %s22 = sphi 0, %s24
      %s25 = sphi 0, %s22
      %s26 = sphi 0, %s25
      %s42 = sphi 0, %s26
      %s46 = sphi 0, %s46
      %s48 = sphi 0, %s46
      %s49 = sphi 0, %s48
      %s63 = sphi 0, %s49
      %s67 = sphi 0, %s67
      %s69 = sphi 0, %s67
      %s70 = sphi 0, %s69
      %s84 = sphi 0, %s70
      %s90 = sphi 0, %s92
      %s93 = sphi 0, %s90
      %s94 = sphi 0, %s93
      %s110 = sphi 0, %s94
    $region4: #{tpu_custom_call.1} parent=1 // loop_header_branch
      %15 = sbr.rel (%p13) target = $region8
    $region5: #{tpu_custom_call.1} parent=1 // loop_body
      %s17 = ssub.s32 %s12, 1
      %s18 = ssub.s32 %s12, 2
      %s19 = sadd.s32 %s12, 1
      %s20 = ssub.s32 %s12, %s19
      %p21 = scmp.eq.s32.totalorder %s20, 0
      %s23 = sadd.s32 %s22, 1
      %s24 = scalar_select %p21, %s22, %s23
      %p27 = pneg %p21
      %p28 = scmp.eq.s32.totalorder %s12, 1
      %p29 = por %p27, %p28
      %p30 = scmp.ne.s32.totalorder %s22, %s25
      %p31 = scmp.eq.s32.totalorder %s12, 0
      %p32 = por %p30, %p31
      %p33 = scmp.ne.s32.totalorder %s22, %s25
      %p34 = scmp.eq.s32.totalorder %s17, 1
      %p35 = por %p33, %p34
      %p36 = scmp.ne.s32.totalorder %s25, %s26
      %p37 = scmp.eq.s32.totalorder %s17, 0
      %p38 = por %p36, %p37
      %p39 = scmp.ne.s32.totalorder %s25, %s26
      %p40 = scmp.eq.s32.totalorder %s18, 1
      %p41 = por %p39, %p40
      %p43 = scmp.ne.s32.totalorder %s26, %s42
      %p44 = scmp.eq.s32.totalorder %s18, 0
      %p45 = por %p43, %p44
      %s47 = sadd.s32 %s46, 1
      %p50 = scmp.eq.s32.totalorder %s12, 1
      %p51 = scmp.ne.s32.totalorder %s46, %s48
      %p52 = scmp.eq.s32.totalorder %s12, 0
      %p53 = por %p51, %p52
      %p54 = scmp.ne.s32.totalorder %s46, %s48
      %p55 = scmp.eq.s32.totalorder %s17, 1
      %p56 = por %p54, %p55
      %p57 = scmp.ne.s32.totalorder %s48, %s49
      %p58 = scmp.eq.s32.totalorder %s17, 0
      %p59 = por %p57, %p58
      %p60 = scmp.ne.s32.totalorder %s48, %s49
      %p61 = scmp.eq.s32.totalorder %s18, 1
      %p62 = por %p60, %p61
      %p64 = scmp.ne.s32.totalorder %s49, %s63
      %p65 = scmp.eq.s32.totalorder %s18, 0
      %p66 = por %p64, %p65
      %s68 = sadd.s32 %s67, 1
      %p71 = scmp.eq.s32.totalorder %s12, 1
      %p72 = scmp.ne.s32.totalorder %s67, %s69
      %p73 = scmp.eq.s32.totalorder %s12, 0
      %p74 = por %p72, %p73
      %p75 = scmp.ne.s32.totalorder %s67, %s69
      %p76 = scmp.eq.s32.totalorder %s17, 1
      %p77 = por %p75, %p76
      %p78 = scmp.ne.s32.totalorder %s69, %s70
      %p79 = scmp.eq.s32.totalorder %s17, 0
      %p80 = por %p78, %p79
      %p81 = scmp.ne.s32.totalorder %s69, %s70
      %p82 = scmp.eq.s32.totalorder %s18, 1
      %p83 = por %p81, %p82
      %p85 = scmp.ne.s32.totalorder %s70, %s84
      %p86 = scmp.eq.s32.totalorder %s18, 0
      %p87 = por %p85, %p86
      %s88 = ssub.s32 %s12, %s19
      %p89 = scmp.eq.s32.totalorder %s88, 0
      %s91 = sadd.s32 %s90, 1
      %s92 = scalar_select %p89, %s90, %s91
      %p95 = pneg %p89
      %p96 = scmp.eq.s32.totalorder %s12, 1
      %p97 = por %p95, %p96
      %p98 = scmp.ne.s32.totalorder %s90, %s93
      %p99 = scmp.eq.s32.totalorder %s12, 0
      %p100 = por %p98, %p99
      %p101 = scmp.ne.s32.totalorder %s90, %s93
      %p102 = scmp.eq.s32.totalorder %s17, 1
      %p103 = por %p101, %p102
      %p104 = scmp.ne.s32.totalorder %s93, %s94
      %p105 = scmp.eq.s32.totalorder %s17, 0
      %p106 = por %p104, %p105
      %p107 = scmp.ne.s32.totalorder %s93, %s94
      %p108 = scmp.eq.s32.totalorder %s18, 1
      %p109 = por %p107, %p108
      %p111 = scmp.ne.s32.totalorder %s94, %s110
      %p112 = scmp.eq.s32.totalorder %s18, 0
      %p113 = por %p111, %p112
      %p114 = scmp.le.s32.totalorder 1, %s12
      %p115 = scmp.lt.s32.totalorder %s12, 3
      %p116 = pnand %p114, %p115
      %p117 = pneg %p116
      // Predicated region
      $region9: #{tpu_custom_call.1} parent=5 // pred_check
        _
      $region10: #{tpu_custom_call.1} parent=5 // pred_check_branch
        %119 = sbr.rel (%p116) target = $region12
      $region11: #{tpu_custom_call.1} parent=5 // pred_region
        %s120 = ssub.s32 %s12, 1
        // Predicated region
        $region13: #{tpu_custom_call.1} parent=11 // pred_check
          %p121 = pneg %p59
        $region14: #{tpu_custom_call.1} parent=11 // pred_check_branch
          %123 = sbr.rel (%p121) target = $region16
        $region15: #{tpu_custom_call.1} parent=11 // pred_region
          _
        $region16: #{tpu_custom_call.1} parent=11 // pred_fallthru
          _
        // Predicated region
        $region17: #{tpu_custom_call.1} parent=11 // pred_check
          %p124 = pneg %p80
        $region18: #{tpu_custom_call.1} parent=11 // pred_check_branch
          %126 = sbr.rel (%p124) target = $region20
        $region19: #{tpu_custom_call.1} parent=11 // pred_region
          _
        $region20: #{tpu_custom_call.1} parent=11 // pred_fallthru
          _
      $region12: #{tpu_custom_call.1} parent=5 // pred_fallthru
        _
      %p127 = scmp.lt.s32.totalorder %s12, 2
      // Predicated region
      $region21: #{tpu_custom_call.1} parent=5 // pred_check
        %p128 = pneg %p127
      $region22: #{tpu_custom_call.1} parent=5 // pred_check_branch
        %130 = sbr.rel (%p128) target = $region24
      $region23: #{tpu_custom_call.1} parent=5 // pred_region
        // Predicated region
        $region25: #{tpu_custom_call.1} parent=23 // pred_check
          %p131 = pneg %p32
        $region26: #{tpu_custom_call.1} parent=23 // pred_check_branch
          %133 = sbr.rel (%p131) target = $region28
        $region27: #{tpu_custom_call.1} parent=23 // pred_region
          %s134 = smul.u32 8, %s12
          %p135 = scmp.lt.s32.totalorder %s134, 15
          %s136 = scalar_select %p135, %s134, 15
          %s137 = smul.addr %s136, 8
          %s138 = scalar_lea.vmem %s0, %s137
          %s139 = smul.u32 8, %s12
        $region28: #{tpu_custom_call.1} parent=23 // pred_fallthru
          _
      $region24: #{tpu_custom_call.1} parent=5 // pred_fallthru
        _
      %p140 = scmp.le.s32.totalorder 1, %s12
      %p141 = scmp.lt.s32.totalorder %s12, 3
      %p142 = pnand %p140, %p141
      %p143 = pneg %p142
      // Predicated region
      $region29: #{tpu_custom_call.1} parent=5 // pred_check
        _
      $region30: #{tpu_custom_call.1} parent=5 // pred_check_branch
        %145 = sbr.rel (%p142) target = $region32
      $region31: #{tpu_custom_call.1} parent=5 // pred_region
        %s146 = ssub.s32 %s12, 1
        %s147 = smul.u32 8, %s17
        %p148 = scmp.lt.s32.totalorder %s147, 15
        %s149 = scalar_select %p148, %s147, 15
        %s150 = smul.addr %s149, 8
        %s151 = scalar_lea.vmem %s0, %s150
        %p152 = pneg %p38
        %p153 = pneg %p35
        %p154 = pneg %p59
        %p155 = pneg %p56
        %p156 = pneg %p80
        %p157 = pneg %p77
        %p158 = pneg %p106
        %p159 = pneg %p103
        %s160 = sand.u32 %s93, 1
        %s161 = scalar_lea.sflag [#allocation3], %s160
        %s162 = sand.u32 %s93, 1
        %s163 = smul.addr %s162, 192
        %s164 = scalar_lea.vmem [#allocation2], %s163
        %s165 = smul.u32 8, %s17
        %p166 = scmp.lt.s32.totalorder %s165, 15
        %s167 = scalar_select %p166, %s165, 15
        %s168 = smul.addr %s167, 8
        %s169 = scalar_lea.vmem %s0, %s168
        %s170 = smul.u32 8, %s17
        %s171 = smul.u32 8, %s17
        %v172 = vld [vmem:[%s169] sm:$0xff]
        %v173 = vld [vmem:[%s169 + $0x8] sm:$0xff]
        %v174 = vld [vmem:[%s169 + $0x10] sm:$0xff]
        %v175 = vld [vmem:[%s169 + $0x18] sm:$0xff]
        %v176 = vld [vmem:[%s169 + $0x20] sm:$0xff]
        %v177 = vld [vmem:[%s169 + $0x28] sm:$0xff]
        %v178 = vld [vmem:[%s169 + $0x30] sm:$0xff]
        %v179 = vld [vmem:[%s169 + $0x38] sm:$0xff]
        %v180 = vld [vmem:[%s1] sm:$0xff]
        %v181 = vld [vmem:[%s1 + $0x8] sm:$0xff]
        %v182 = vld [vmem:[%s1 + $0x10] sm:$0xff]
        %v183 = vld [vmem:[%s1 + $0x18] sm:$0xff]
        %v184 = vld [vmem:[%s1 + $0x20] sm:$0xff]
        %v185 = vld [vmem:[%s1 + $0x28] sm:$0xff]
        %v186 = vld [vmem:[%s1 + $0x30] sm:$0xff]
        %v187 = vld [vmem:[%s1 + $0x38] sm:$0xff]
        %v188 = vld [vmem:[%s2] sm:$0x3]
        %v190 = vlaneseq
        %v191 = vshrl.u32 %v190, 7
        %v192 = vsub.s32 0, %v191
        %v193 = vrot.slane %v188, %v192
        %v194 = vlaneseq
        %v195 = vshrl.u32 %v194, 7
        %v196 = vsub.s32 1, %v195
        %v197 = vrot.slane %v188, %v196
        %vm200 = vcmask 261120
        %v202 = vsel %vm200, %v172, 0
        %v205 = vsel %vm200, %v173, 0
        %v208 = vsel %vm200, %v174, 0
        %v211 = vsel %vm200, %v175, 0
        %v214 = vsel %vm200, %v176, 0
        %v217 = vsel %vm200, %v177, 0
        %v220 = vsel %vm200, %v178, 0
        %v223 = vsel %vm200, %v179, 0
        %225 = vmatprep.subr.mxu0 %v181
        %226 = vmatpush1.msra.mxu0 %v180
        %227 = vmatprep.subr.mxu0 %v183
        %228 = vmatpush1.msra.mxu0 %v182
        %229 = vmatprep.subr.mxu0 %v185
        %230 = vmatpush1.msra.mxu0 %v184
        %231 = vmatprep.subr.mxu0 %v187
        %232 = vmatpush1.msra.mxu0 %v186
        %233 = vmatprep.subr.mxu0 0.0
        %234 = vmatpush1.msra.mxu0 0.0
        %235 = vmatprep.subr.mxu0 0.0
        %236 = vmatpush1.msra.mxu0 0.0
        %237 = vmatprep.subr.mxu0 0.0
        %238 = vmatpush1.msra.mxu0 0.0
        %239 = vmatprep.subr.mxu0 0.0
        %240 = vmatpush1.msra.mxu0 0.0
        %241 = vmatprep.subr.mxu0 0.0
        %242 = vmatpush1.msra.mxu0 0.0
        %243 = vmatprep.subr.mxu0 0.0
        %244 = vmatpush1.msra.mxu0 0.0
        %245 = vmatprep.subr.mxu0 0.0
        %246 = vmatpush1.msra.mxu0 0.0
        %247 = vmatprep.subr.mxu0 0.0
        %248 = vmatpush1.msra.mxu0 0.0
        %249 = vmatprep.subr.mxu0 0.0
        %250 = vmatpush1.msra.mxu0 0.0
        %251 = vmatprep.subr.mxu0 0.0
        %252 = vmatpush1.msra.mxu0 0.0
        %253 = vmatprep.subr.mxu0 0.0
        %254 = vmatpush1.msra.mxu0 0.0
        %255 = vmatprep.subr.mxu0 0.0
        %256 = vmatpush1.msra.mxu0 0.0
        %257 = vmatprep.subr.mxu0 0.0
        %258 = vmatpush1.msra.mxu0 0.0
        %259 = vmatprep.subr.mxu0 0.0
        %260 = vmatpush1.msra.mxu0 0.0
        %261 = vmatprep.subr.mxu0 0.0
        %262 = vmatpush1.msra.mxu0 0.0
        %263 = vmatprep.subr.mxu0 0.0
        %264 = vmatpush1.msra.mxu0 0.0
        %265 = vmatprep.subr.mxu0 0.0
        %266 = vmatpush1.msra.mxu0 0.0
        %267 = vmatprep.subr.mxu0 0.0
        %268 = vmatpush1.msra.mxu0 0.0
        %269 = vmatprep.subr.mxu0 0.0
        %270 = vmatpush1.msra.mxu0 0.0
        %271 = vmatprep.subr.mxu0 0.0
        %272 = vmatpush1.msra.mxu0 0.0
        %273 = vmatprep.subr.mxu0 0.0
        %274 = vmatpush1.msra.mxu0 0.0
        %275 = vmatprep.subr.mxu0 0.0
        %276 = vmatpush1.msra.mxu0 0.0
        %277 = vmatprep.subr.mxu0 0.0
        %278 = vmatpush1.msra.mxu0 0.0
        %279 = vmatprep.subr.mxu0 0.0
        %280 = vmatpush1.msra.mxu0 0.0
        %281 = vmatprep.subr.mxu0 0.0
        %282 = vmatpush1.msra.mxu0 0.0
        %283 = vmatprep.subr.mxu0 0.0
        %284 = vmatpush1.msra.mxu0 0.0
        %285 = vmatprep.subr.mxu0 0.0
        %286 = vmatpush1.msra.mxu0 0.0
        %287 = vmatprep.subr.mxu0 0.0
        %288 = vmatpush1.msra.mxu0 0.0
        %289 = vmatprep.mubr.f32.mxu0 0.0
        %290 = vmatmul.mubr.f32.gmra.mrb[0].mxu0 %v202
        %v291 = vpop.f32.mrb[0].mxu0
        %v292 = vadd.f32 %v193, %v291
        %v293 = vpop.f32.mrb[0].mxu0
        %v294 = vadd.f32 %v197, %v293
        %295 = vmatprep.mubr.f32.mxu0 0.0
        %296 = vmatmul.mubr.f32.gmra.mrb[0].mxu0 %v205
        %v297 = vpop.f32.mrb[0].mxu0
        %v298 = vadd.f32 %v193, %v297
        %v299 = vpop.f32.mrb[0].mxu0
        %v300 = vadd.f32 %v197, %v299
        %301 = vmatprep.mubr.f32.mxu0 0.0
        %302 = vmatmul.mubr.f32.gmra.mrb[0].mxu0 %v208
        %v303 = vpop.f32.mrb[0].mxu0
        %v304 = vadd.f32 %v193, %v303
        %v305 = vpop.f32.mrb[0].mxu0
        %v306 = vadd.f32 %v197, %v305
        %307 = vmatprep.mubr.f32.mxu0 0.0
        %308 = vmatmul.mubr.f32.gmra.mrb[0].mxu0 %v211
        %v309 = vpop.f32.mrb[0].mxu0
        %v310 = vadd.f32 %v193, %v309
        %v311 = vpop.f32.mrb[0].mxu0
        %v312 = vadd.f32 %v197, %v311
        %313 = vmatprep.mubr.f32.mxu0 0.0
        %314 = vmatmul.mubr.f32.gmra.mrb[0].mxu0 %v214
        %v315 = vpop.f32.mrb[0].mxu0
        %v316 = vadd.f32 %v193, %v315
        %v317 = vpop.f32.mrb[0].mxu0
        %v318 = vadd.f32 %v197, %v317
        %319 = vmatprep.mubr.f32.mxu0 0.0
        %320 = vmatmul.mubr.f32.gmra.mrb[0].mxu0 %v217
        %v321 = vpop.f32.mrb[0].mxu0
        %v322 = vadd.f32 %v193, %v321
        %v323 = vpop.f32.mrb[0].mxu0
        %v324 = vadd.f32 %v197, %v323
        %325 = vmatprep.mubr.f32.mxu0 0.0
        %326 = vmatmul.mubr.f32.gmra.mrb[0].mxu0 %v220
        %v327 = vpop.f32.mrb[0].mxu0
        %v328 = vadd.f32 %v193, %v327
        %v329 = vpop.f32.mrb[0].mxu0
        %v330 = vadd.f32 %v197, %v329
        %331 = vmatprep.mubr.f32.mxu0 0.0
        %332 = vmatmul.mubr.f32.gmra.mrb[0].mxu0 %v223
        %v333 = vpop.f32.mrb[0].mxu0
        %v334 = vadd.f32 %v193, %v333
        %v335 = vpop.f32.mrb[0].mxu0
        %v336 = vadd.f32 %v197, %v335
        %337 = vdwg.mxu0
        %vm338 = vcmask 392192
        %339 = vst.msk [vmem:[%s164] sm:$0xff] %vm338, %v292
        %s340 = scalar_lea.vmem %s164, 24 [#allocation2]
        %341 = vst.msk [vmem:[%s340] sm:$0xff] %vm338, %v298
        %s342 = scalar_lea.vmem %s164, 48 [#allocation2]
        %343 = vst.msk [vmem:[%s342] sm:$0xff] %vm338, %v304
        %s344 = scalar_lea.vmem %s164, 72 [#allocation2]
        %345 = vst.msk [vmem:[%s344] sm:$0xff] %vm338, %v310
        %s346 = scalar_lea.vmem %s164, 96 [#allocation2]
        %347 = vst.msk [vmem:[%s346] sm:$0xff] %vm338, %v316
        %s348 = scalar_lea.vmem %s164, 120 [#allocation2]
        %349 = vst.msk [vmem:[%s348] sm:$0xff] %vm338, %v322
        %s350 = scalar_lea.vmem %s164, 144 [#allocation2]
        %351 = vst.msk [vmem:[%s350] sm:$0xff] %vm338, %v328
        %s352 = scalar_lea.vmem %s164, 168 [#allocation2]
        %353 = vst.msk [vmem:[%s352] sm:$0xff] %vm338, %v334
        %355 = vrot.lane.b32.xlu0 %v292, 80
        %v356 = vpop.permute.xlu0 %355
        %s358 = scalar_lea.vmem %s164, 8 [#allocation2]
        %359 = vst.msk [vmem:[%s358] sm:$0xff] %vm338, %v356
        %361 = vrot.lane.b32.xlu0 %v298, 80
        %v362 = vpop.permute.xlu0 %361
        %s364 = scalar_lea.vmem %s164, 32 [#allocation2]
        %365 = vst.msk [vmem:[%s364] sm:$0xff] %vm338, %v362
        %367 = vrot.lane.b32.xlu0 %v304, 80
        %v368 = vpop.permute.xlu0 %367
        %s370 = scalar_lea.vmem %s164, 56 [#allocation2]
        %371 = vst.msk [vmem:[%s370] sm:$0xff] %vm338, %v368
        %373 = vrot.lane.b32.xlu0 %v310, 80
        %v374 = vpop.permute.xlu0 %373
        %s376 = scalar_lea.vmem %s164, 80 [#allocation2]
        %377 = vst.msk [vmem:[%s376] sm:$0xff] %vm338, %v374
        %379 = vrot.lane.b32.xlu0 %v316, 80
        %v380 = vpop.permute.xlu0 %379
        %s382 = scalar_lea.vmem %s164, 104 [#allocation2]
        %383 = vst.msk [vmem:[%s382] sm:$0xff] %vm338, %v380
        %385 = vrot.lane.b32.xlu0 %v322, 80
        %v386 = vpop.permute.xlu0 %385
        %s388 = scalar_lea.vmem %s164, 128 [#allocation2]
        %389 = vst.msk [vmem:[%s388] sm:$0xff] %vm338, %v386
        %391 = vrot.lane.b32.xlu0 %v328, 80
        %v392 = vpop.permute.xlu0 %391
        %s394 = scalar_lea.vmem %s164, 152 [#allocation2]
        %395 = vst.msk [vmem:[%s394] sm:$0xff] %vm338, %v392
        %397 = vrot.lane.b32.xlu0 %v334, 80
        %v398 = vpop.permute.xlu0 %397
        %s400 = scalar_lea.vmem %s164, 176 [#allocation2]
        %401 = vst.msk [vmem:[%s400] sm:$0xff] %vm338, %v398
        %403 = vrot.lane.b32.xlu0 %v292, 32
        %v404 = vpop.permute.xlu0 %403
        %405 = vrot.lane.b32.xlu0 %v294, 32
        %v406 = vpop.permute.xlu0 %405
        %v407 = vsel %vm200, %v404, %v406
        %s409 = scalar_lea.vmem %s164, 16 [#allocation2]
        %410 = vst.msk [vmem:[%s409] sm:$0xff] %vm338, %v407
        %412 = vrot.lane.b32.xlu0 %v298, 32
        %v413 = vpop.permute.xlu0 %412
        %414 = vrot.lane.b32.xlu0 %v300, 32
        %v415 = vpop.permute.xlu0 %414
        %v416 = vsel %vm200, %v413, %v415
        %s418 = scalar_lea.vmem %s164, 40 [#allocation2]
        %419 = vst.msk [vmem:[%s418] sm:$0xff] %vm338, %v416
        %421 = vrot.lane.b32.xlu0 %v304, 32
        %v422 = vpop.permute.xlu0 %421
        %423 = vrot.lane.b32.xlu0 %v306, 32
        %v424 = vpop.permute.xlu0 %423
        %v425 = vsel %vm200, %v422, %v424
        %s427 = scalar_lea.vmem %s164, 64 [#allocation2]
        %428 = vst.msk [vmem:[%s427] sm:$0xff] %vm338, %v425
        %430 = vrot.lane.b32.xlu0 %v310, 32
        %v431 = vpop.permute.xlu0 %430
        %432 = vrot.lane.b32.xlu0 %v312, 32
        %v433 = vpop.permute.xlu0 %432
        %v434 = vsel %vm200, %v431, %v433
        %s436 = scalar_lea.vmem %s164, 88 [#allocation2]
        %437 = vst.msk [vmem:[%s436] sm:$0xff] %vm338, %v434
        %439 = vrot.lane.b32.xlu0 %v316, 32
        %v440 = vpop.permute.xlu0 %439
        %441 = vrot.lane.b32.xlu0 %v318, 32
        %v442 = vpop.permute.xlu0 %441
        %v443 = vsel %vm200, %v440, %v442
        %s445 = scalar_lea.vmem %s164, 112 [#allocation2]
        %446 = vst.msk [vmem:[%s445] sm:$0xff] %vm338, %v443
        %448 = vrot.lane.b32.xlu0 %v322, 32
        %v449 = vpop.permute.xlu0 %448
        %450 = vrot.lane.b32.xlu0 %v324, 32
        %v451 = vpop.permute.xlu0 %450
        %v452 = vsel %vm200, %v449, %v451
        %s454 = scalar_lea.vmem %s164, 136 [#allocation2]
        %455 = vst.msk [vmem:[%s454] sm:$0xff] %vm338, %v452
        %457 = vrot.lane.b32.xlu0 %v328, 32
        %v458 = vpop.permute.xlu0 %457
        %459 = vrot.lane.b32.xlu0 %v330, 32
        %v460 = vpop.permute.xlu0 %459
        %v461 = vsel %vm200, %v458, %v460
        %s463 = scalar_lea.vmem %s164, 160 [#allocation2]
        %464 = vst.msk [vmem:[%s463] sm:$0xff] %vm338, %v461
        %466 = vrot.lane.b32.xlu0 %v334, 32
        %v467 = vpop.permute.xlu0 %466
        %468 = vrot.lane.b32.xlu0 %v336, 32
        %v469 = vpop.permute.xlu0 %468
        %v470 = vsel %vm200, %v467, %v469
        %s472 = scalar_lea.vmem %s164, 184 [#allocation2]
        %473 = vst.msk [vmem:[%s472] sm:$0xff] %vm338, %v470
        %s474 = sand.u32 %s93, 1
        %s475 = scalar_lea.sflag [#allocation3], %s474
        %s476 = sand.u32 %s93, 1
        %s477 = smul.addr %s476, 192
        %s478 = scalar_lea.vmem [#allocation2], %s477
        // Predicated region
        $region33: #{tpu_custom_call.1} parent=31 // pred_check
          %p479 = pneg %p103
        $region34: #{tpu_custom_call.1} parent=31 // pred_check_branch
          %481 = sbr.rel (%p479) target = $region36
        $region35: #{tpu_custom_call.1} parent=31 // pred_region
          %s482 = smul.u32 8, %s17
          %s484 = ssub.s32 3072, 3072
          %485 = vsyncadd %s475, %s484
          %s486 = smul.addr %s482, 3
          %s487 = smul.addr %s486, 128
          %s488 = scalar_lea.hbm %s3, %s487
          %s489 = sshll.u32 %s478, 4
          %s490 = int_to_ptr.vmem [resolvable:$true] %s489
          %495 = dma.vmem_to_hbm [thread:$0]  %s490, 3072, %s488, %s475, 128, 128, 8
        $region36: #{tpu_custom_call.1} parent=31 // pred_fallthru
          _
      $region32: #{tpu_custom_call.1} parent=5 // pred_fallthru
        _
      %p496 = scmp.le.s32.totalorder 2, %s12
      // Predicated region
      $region37: #{tpu_custom_call.1} parent=5 // pred_check
        %p497 = pneg %p496
      $region38: #{tpu_custom_call.1} parent=5 // pred_check_branch
        %499 = sbr.rel (%p497) target = $region40
      $region39: #{tpu_custom_call.1} parent=5 // pred_region
        %s500 = ssub.s32 %s12, 2
        // Predicated region
        $region41: #{tpu_custom_call.1} parent=39 // pred_check
          %p501 = pneg %p109
        $region42: #{tpu_custom_call.1} parent=39 // pred_check_branch
          %503 = sbr.rel (%p501) target = $region44
        $region43: #{tpu_custom_call.1} parent=39 // pred_region
          %s504 = sand.u32 %s94, 1
          %s505 = scalar_lea.sflag [#allocation3], %s504
          %s506 = sand.u32 %s94, 1
          %s507 = smul.addr %s506, 192
          %s508 = scalar_lea.vmem [#allocation2], %s507
          %509 = dma.done %s505, 3072
        $region44: #{tpu_custom_call.1} parent=39 // pred_fallthru
          _
      $region40: #{tpu_custom_call.1} parent=5 // pred_fallthru
        _
    $region6: #{tpu_custom_call.1} parent=1 // loop_footer
      %s16 = sadd.s32 1, %s12
    $region7: #{tpu_custom_call.1} parent=1 // loop_footer_branch
      %11 = sbr.rel target = $region3
    $region8: #{tpu_custom_call.1} parent=1 // loop_exit
      _
    %510 = vsyncpa [#allocation3], 1
    %s511 = scalar_lea.sflag [#allocation3], 1
    %512 = vsyncpa %s511, 1

</llo_original>
